<compile_context>
chip_gen: v7x
topology: tpu7x:2x2x1
jax: 0.10.0
libtpu: 0.0.40
codegen_flags: <defaults>
</compile_context>

<pallas_src>
import math

import jax
import jax.numpy as jnp
from jax.experimental import pallas as pl
from jax.experimental.pallas import tpu as pltpu


# ----------------------------------------------------------------------------
# Parameter / buffer setup (plain JAX glue, mirrors nn.Module.__init__)
# ----------------------------------------------------------------------------
def sincos_table(max_len: int, d_model: int) -> jnp.ndarray:
    """Same table as the AgentEncoding / TimeEncoding register_buffer."""
    assert d_model % 2 == 0, "sin/cos table requires an even d_model"
    pos = jnp.arange(max_len, dtype=jnp.float32)[:, None]
    div = jnp.exp(
        jnp.arange(0, d_model, 2, dtype=jnp.float32) * (-math.log(10000.0) / d_model)
    )
    tab = jnp.zeros((max_len, d_model), dtype=jnp.float32)
    tab = tab.at[:, 0::2].set(jnp.sin(pos * div))
    tab = tab.at[:, 1::2].set(jnp.cos(pos * div))
    return tab


def init_params(key, d_model: int):
    """nn.Linear(1, d_model): weight stored as (d_model,), bias (d_model,)."""
    kw, kb = jax.random.split(key)
    w = jax.random.uniform(kw, (d_model,), jnp.float32, -1.0, 1.0)
    b = jax.random.uniform(kb, (d_model,), jnp.float32, -1.0, 1.0)
    return w, b


# ----------------------------------------------------------------------------
# Pallas kernel (lane-dense folded layout)
#   out[b, r, l] = sum_g x[b, r, g] * wmask[g, l] + (AE+TE)[r, l] + bias[l % M]
# where s = r*G + g, l = g*M + m is the fold of (s, m) into 128-wide lane rows.
# ----------------------------------------------------------------------------
def _make_kernel(bt: int, g: int):
    if g == 1:
        # d_model is already a multiple of 128: one exact VPU mul-add.
        def kernel(x_ref, w_ref, c_ref, brow_ref, o_ref):
            const = c_ref[...] + brow_ref[...]          # (TR, LD), sublane bcast
            w_row = w_ref[...]                          # (1, LD)
            for bb in range(bt):                        # static unroll, bt small
                o_ref[bb] = x_ref[bb] * w_row + const   # (TR,1)*(1,LD) lane bcast
    else:
        # General case: one small-K MXU matmul per batch row of the tile.
        def kernel(x_ref, w_ref, c_ref, brow_ref, o_ref):
            const = c_ref[...] + brow_ref[...]          # (TR, LD)
            wm = w_ref[...]                             # (G, LD)
            for bb in range(bt):
                xb = jnp.dot(
                    x_ref[bb], wm,                      # (TR, G) @ (G, LD)
                    preferred_element_type=jnp.float32,
                    precision=jax.lax.Precision.HIGHEST,
                )
                o_ref[bb] = xb + const
    return kernel


# ----------------------------------------------------------------------------
# Tile selection under an explicit VMEM budget
# ----------------------------------------------------------------------------
def _choose_tiles(R: int, batch: int, LD: int,
                  max_rows: int, max_batch: int, vmem_budget: int):
    def footprint(bt, tr):
        x_b = bt * tr * 128 * 4       # x block is lane-padded to 128 in VMEM
        o_b = bt * tr * LD * 4
        c_b = tr * LD * 4
        return 2 * (x_b + o_b + c_b)  # double-buffered pipeline

    # Row tile: full extent if it fits, else largest pow2 candidate dividing R.
    if R <= max_rows:
        tr = R
    else:
        tr = None
        for cand in (8192, 4096, 2048, 1024, 512, 256, 128, 64, 32, 16, 8):
            if cand <= max_rows and R % cand == 0:
                tr = cand
                break
        if tr is None:
            # Ragged grid (Pallas clips the boundary block) instead of one
            # giant tile that would blow the VMEM limit.
            tr = max(8, (max_rows // 8) * 8)

    # Shrink the row tile until a single-batch step fits the VMEM budget.
    while footprint(1, tr) > vmem_budget and tr > 8:
        tr = max(8, (tr // 2 // 8) * 8)

    # Batch tile: largest divisor of batch (capped) that still fits the budget.
    bt = 1
    for cand in range(min(batch, max_batch), 0, -1):
        if batch % cand == 0 and footprint(cand, tr) <= vmem_budget:
            bt = cand
            break
    return tr, bt


# ----------------------------------------------------------------------------
# Wrapper
# ----------------------------------------------------------------------------
def input_embedding(x, w, b, in_len: int, max_len: int = 5000,
                    max_rows_per_tile: int = 4096,
                    max_batch_per_tile: int = 8,
                    vmem_budget_bytes: int = 24 * 1024 * 1024):
    """x: (B, T, D) float32  ->  (B, T*D, d_model) float32"""
    batch, ts_len, ts_dim = x.shape
    d_model = int(w.shape[0])
    S = ts_len * ts_dim
    assert S % in_len == 0, "sequence length must be divisible by look_back"
    num_a = S // in_len
    assert num_a <= max_len and in_len <= max_len, \
        "positional-encoding table too small for this sequence"

    # Static (shape-only) positional constant: AE + TE.  Bias is intentionally
    # NOT folded in, so under jit this whole table const-folds once.
    table = sincos_table(max_len, d_model)
    seq = jnp.arange(S)
    c_static = (table[seq // in_len] + table[seq % in_len]).astype(jnp.float32)  # (S, M)

    # Lane-dense fold: pack G consecutive positions into one lane row whose
    # width LD = G*d_model is a multiple of 128 (unmasked stores / full DMA rows).
    G = math.lcm(d_model, 128) // d_model
    if S % G != 0:
        G = 1  # TODO(synk): odd shapes fall back to masked (<128-lane) stores
    R = S // G
    LD = G * d_model

    x_fold = x.reshape(batch, R, G).astype(jnp.float32)            # (B, R, G)
    c_fold = c_static.reshape(R, LD)                                # (R, LD)
    brow = jnp.tile(b.astype(jnp.float32), G).reshape(1, LD)        # (1, LD)
    if G == 1:
        w_op = w.astype(jnp.float32).reshape(1, LD)                 # (1, LD)
    else:
        lane = jnp.arange(LD)
        w_op = jnp.where((lane // d_model)[None, :] == jnp.arange(G)[:, None],
                         jnp.tile(w.astype(jnp.float32), G)[None, :],
                         0.0)                                       # (G, LD)

    TR, Bt = _choose_tiles(R, batch, LD, max_rows_per_tile,
                           max_batch_per_tile, vmem_budget_bytes)
    grid = (pl.cdiv(R, TR), pl.cdiv(batch, Bt))   # rows outer, batch inner:
                                                  # C block index constant over
                                                  # the inner axis -> fetched
                                                  # once per row tile.

    cost = pl.CostEstimate(
        flops=int(2 * batch * R * G * LD),
        transcendentals=0,
        bytes_accessed=int(4 * (batch * R * G + w_op.size + R * LD + LD
                                + batch * R * LD)),
    )

    out = pl.pallas_call(
        _make_kernel(Bt, G),
        out_shape=jax.ShapeDtypeStruct((batch, R, LD), jnp.float32),
        grid=grid,
        in_specs=[
            pl.BlockSpec((Bt, TR, G), lambda r, bi: (bi, r, 0)),    # x (streamed)
            pl.BlockSpec(w_op.shape, lambda r, bi: (0, 0)),         # weight (resident)
            pl.BlockSpec((TR, LD), lambda r, bi: (r, 0)),           # AE+TE tile
            pl.BlockSpec((1, LD), lambda r, bi: (0, 0)),            # bias row (resident)
        ],
        out_specs=pl.BlockSpec((Bt, TR, LD), lambda r, bi: (bi, r, 0)),
        compiler_params=pltpu.CompilerParams(
            dimension_semantics=("parallel", "arbitrary"),
            vmem_limit_bytes=32 * 1024 * 1024,
        ),
        cost_estimate=cost,
    )(x_fold, w_op, c_fold, brow)

    # Free, layout-preserving un-fold back to the module's output shape.
    return out.reshape(batch, S, d_model)


# ----------------------------------------------------------------------------
# Pure-JAX reference (mirrors the PyTorch forward exactly)
# ----------------------------------------------------------------------------
def input_embedding_ref(x, w, b, in_len: int, max_len: int = 5000):
    batch, ts_len, ts_dim = x.shape
    d_model = w.shape[0]
    S = ts_len * ts_dim
    x_flat = x.reshape(batch * S, 1)
    x_embed = x_flat @ w.reshape(1, d_model) + b          # Linear(1, d_model)
    x_embed = x_embed.reshape(batch, S, d_model)
    table = sincos_table(max_len, d_model)
    num_a = S // in_len
    ae = jnp.repeat(table[:num_a], in_len, axis=0)[:S]    # AgentEncoding.forward
    te = jnp.tile(table[:in_len], (num_a, 1))[:S]         # TimeEncoding.forward
    return x_embed + ae[None] + te[None]


if __name__ == "__main__":
    key = jax.random.PRNGKey(0)
    # (batch, ts_len, ts_dim, d_model, max_rows_per_tile, max_batch_per_tile)
    configs = [
        (2, 8, 4, 32, 4096, 8),    # fold G=4 -> LD=128, single step
        (2, 8, 4, 128, 4096, 8),   # G=1 (VPU mul-add path)
        (2, 16, 4, 32, 8, 8),      # multi row-tile grid, C reused across batch
        (2, 16, 4, 32, 8, 1),      # row + batch grid axes (Bt=1)
        (3, 8, 4, 64, 4096, 8),    # odd batch, Bt=3 in-kernel unroll, G=2 dot
        (2, 8, 4, 192, 4096, 8),   # lcm fold: G=2, LD=384 (multiple of 128)
    ]
    for idx, (batch, ts_len, ts_dim, d_model, max_rows, max_bt) in enumerate(configs):
        kx, kp, key = jax.random.split(key, 3)
        x = jax.random.normal(kx, (batch, ts_len, ts_dim), dtype=jnp.float32)
        w, b = init_params(kp, d_model)
        in_len = ts_len

        out = input_embedding(x, w, b, in_len,
                              max_rows_per_tile=max_rows,
                              max_batch_per_tile=max_bt)
        out = jax.block_until_ready(out)

        ref = input_embedding_ref(x, w, b, in_len)
        assert out.shape == (batch, ts_len * ts_dim, d_model)
        assert jnp.allclose(out, ref, atol=2e-5, rtol=2e-5), f"mismatch in config {idx}"

    print("KERNEL_OK")
</pallas_src>

<mosaic_0001>
module attributes {stable_mosaic.version = 11 : i64} {
  func.func @kernel(%arg0: i32, %arg1: i32, %arg2: memref<2x8x4xf32, #tpu.memory_space<vmem>>, %arg3: memref<4x128xf32, #tpu.memory_space<vmem>>, %arg4: memref<8x128xf32, #tpu.memory_space<vmem>>, %arg5: memref<1x128xf32, #tpu.memory_space<vmem>>, %arg6: memref<2x8x128xf32, #tpu.memory_space<vmem>>) attributes {dimension_semantics = [#tpu.dimension_semantics<parallel>, #tpu.dimension_semantics<arbitrary>], iteration_bounds = array<i64: 1, 1>, scalar_prefetch = 0 : i64, scratch_operands = 0 : i64, tpu.core_type = #tpu.core_type<tc>, window_params = [{transform_indices = @transform_0, window_bounds = array<i64: 2, 8, 4>}, {pipeline_mode = #tpu.pipeline_mode<synchronous>, transform_indices = @transform_1, window_bounds = array<i64: 4, 128>}, {transform_indices = @transform_2, window_bounds = array<i64: 8, 128>}, {pipeline_mode = #tpu.pipeline_mode<synchronous>, transform_indices = @transform_3, window_bounds = array<i64: 1, 128>}, {transform_indices = @transform_4, window_bounds = array<i64: 2, 8, 128>}]} {
    %c0 = arith.constant 0 : index
    %c0_0 = arith.constant 0 : index
    %0 = vector.load %arg4[%c0, %c0_0] : memref<8x128xf32, #tpu.memory_space<vmem>>, vector<8x128xf32>
    %c0_1 = arith.constant 0 : index
    %c0_2 = arith.constant 0 : index
    %1 = vector.load %arg5[%c0_1, %c0_2] : memref<1x128xf32, #tpu.memory_space<vmem>>, vector<1x128xf32>
    %2 = vector.broadcast %1 : vector<1x128xf32> to vector<8x128xf32>
    %3 = arith.addf %0, %2 : vector<8x128xf32>
    %c0_3 = arith.constant 0 : index
    %c0_4 = arith.constant 0 : index
    %4 = vector.load %arg3[%c0_3, %c0_4] : memref<4x128xf32, #tpu.memory_space<vmem>>, vector<4x128xf32>
    %c0_5 = arith.constant 0 : index
    %c0_6 = arith.constant 0 : index
    %c0_7 = arith.constant 0 : index
    %5 = vector.load %arg2[%c0_5, %c0_6, %c0_7] : memref<2x8x4xf32, #tpu.memory_space<vmem>>, vector<1x8x4xf32>
    %6 = vector.shape_cast %5 : vector<1x8x4xf32> to vector<8x4xf32>
    %cst = arith.constant dense<0.000000e+00> : vector<8x128xf32>
    %7 = tpu.matmul %6, %4, %cst {dimension_numbers = #tpu.dot_dimension_numbers<[1], [0], [0], [1], [0, 0, 1, 1], [], []>, precision = #tpu.contract_precision<fp32>} : vector<8x4xf32>, vector<4x128xf32>, vector<8x128xf32> -> vector<8x128xf32>
    %8 = arith.addf %7, %3 : vector<8x128xf32>
    %c0_8 = arith.constant 0 : index
    %c0_9 = arith.constant 0 : index
    %c0_10 = arith.constant 0 : index
    %9 = vector.load %arg6[%c0_8, %c0_9, %c0_10] : memref<2x8x128xf32, #tpu.memory_space<vmem>>, vector<1x8x128xf32>
    %10 = vector.shape_cast %9 : vector<1x8x128xf32> to vector<8x128xf32>
    %11 = vector.shape_cast %8 : vector<8x128xf32> to vector<1x8x128xf32>
    tpu.vector_store %arg6[%c0_8, %c0_9, %c0_10], %11 {strides = array<i32>} : memref<2x8x128xf32, #tpu.memory_space<vmem>>, vector<1x8x128xf32>,
    %c1 = arith.constant 1 : index
    %c0_11 = arith.constant 0 : index
    %c0_12 = arith.constant 0 : index
    %12 = vector.load %arg2[%c1, %c0_11, %c0_12] : memref<2x8x4xf32, #tpu.memory_space<vmem>>, vector<1x8x4xf32>
    %13 = vector.shape_cast %12 : vector<1x8x4xf32> to vector<8x4xf32>
    %cst_13 = arith.constant dense<0.000000e+00> : vector<8x128xf32>
    %14 = tpu.matmul %13, %4, %cst_13 {dimension_numbers = #tpu.dot_dimension_numbers<[1], [0], [0], [1], [0, 0, 1, 1], [], []>, precision = #tpu.contract_precision<fp32>} : vector<8x4xf32>, vector<4x128xf32>, vector<8x128xf32> -> vector<8x128xf32>
    %15 = arith.addf %14, %3 : vector<8x128xf32>
    %c1_14 = arith.constant 1 : index
    %c0_15 = arith.constant 0 : index
    %c0_16 = arith.constant 0 : index
    %16 = vector.load %arg6[%c1_14, %c0_15, %c0_16] : memref<2x8x128xf32, #tpu.memory_space<vmem>>, vector<1x8x128xf32>
    %17 = vector.shape_cast %16 : vector<1x8x128xf32> to vector<8x128xf32>
    %18 = vector.shape_cast %15 : vector<8x128xf32> to vector<1x8x128xf32>
    tpu.vector_store %arg6[%c1_14, %c0_15, %c0_16], %18 {strides = array<i32>} : memref<2x8x128xf32, #tpu.memory_space<vmem>>, vector<1x8x128xf32>,
    return
  }
  func.func @transform_0(%arg0: i32, %arg1: i32) -> (i32, i32, i32) {
    %c0_i32 = arith.constant 0 : i32
    %c0_i32_0 = arith.constant 0 : i32
    return %arg1, %arg0, %c0_i32 : i32, i32, i32
  }
  func.func @transform_1(%arg0: i32, %arg1: i32) -> (i32, i32) {
    %c0_i32 = arith.constant 0 : i32
    %c0_i32_0 = arith.constant 0 : i32
    %c0_i32_1 = arith.constant 0 : i32
    return %c0_i32, %c0_i32_0 : i32, i32
  }
  func.func @transform_2(%arg0: i32, %arg1: i32) -> (i32, i32) {
    %c0_i32 = arith.constant 0 : i32
    %c0_i32_0 = arith.constant 0 : i32
    return %arg0, %c0_i32 : i32, i32
  }
  func.func @transform_3(%arg0: i32, %arg1: i32) -> (i32, i32) {
    %c0_i32 = arith.constant 0 : i32
    %c0_i32_0 = arith.constant 0 : i32
    %c0_i32_1 = arith.constant 0 : i32
    return %c0_i32, %c0_i32_0 : i32, i32
  }
  func.func @transform_4(%arg0: i32, %arg1: i32) -> (i32, i32, i32) {
    %c0_i32 = arith.constant 0 : i32
    %c0_i32_0 = arith.constant 0 : i32
    return %arg1, %arg0, %c0_i32 : i32, i32, i32
  }
}

</mosaic_0001>

<llo_original>
// kernel: tpu_custom_call.1
$region0: #{tpu_custom_call.1}
  #allocation0 [shape = 'u32[]', space=smem, size = 0x4, offset = 0x4, fixed_abs, tag = 'smem constant byte address 0x4 - core index']
  #allocation1 [shape = 'u32[144,128]{1,0:T(1,128)}', space=vmem, size = 0x12000, scoped, tag = 'internal scratch']
  %s0 = inlined_call_operand.vmem [shape: f32[2,8,4], index: 0, kind: input, shape index: {}]
  %s1 = inlined_call_operand.vmem [shape: f32[4,128], index: 1, kind: input, shape index: {}]
  %s2 = inlined_call_operand.vmem [shape: f32[8,128], index: 2, kind: input, shape index: {}]
  %s3 = inlined_call_operand.vmem [shape: f32[1,128], index: 3, kind: input, shape index: {}]
  %s4 = inlined_call_operand.hbm [shape: f32[2,8,128], index: 4, kind: output, shape index: {}]
  %s5 = sld [smem:[#allocation0]]
  $region26: #{tpu_custom_call.1} parent=0
    _
  %s7 = ssub.s32 1, %s5
  %s8 = scalar_select 0, %s7, %s5
  $region1: #{tpu_custom_call.1} parent=0
    #allocation2 [shape = 'u8[8192]{0}', space=vmem, size = 0x2000, scoped, tag = 'output window, operand 0, single buffered']
    #allocation3 [shape = 's32[1]{0}', space=sflag, size = 0x4, scoped, tag = 'scoped memory for tpu_custom_call.1']
    %9 = vsyncpa [#allocation3], 0
    // Predicated region
    $region2: #{tpu_custom_call.1} parent=1 // pred_check
      _
    $region3: #{tpu_custom_call.1} parent=1 // pred_check_branch
      %11 = sbr.rel (0) target = $region5
    $region4: #{tpu_custom_call.1} parent=1 // pred_region
      _
    $region5: #{tpu_custom_call.1} parent=1 // pred_fallthru
      _
    // Predicated region
    $region6: #{tpu_custom_call.1} parent=1 // pred_check
      _
    $region7: #{tpu_custom_call.1} parent=1 // pred_check_branch
      %13 = sbr.rel (0) target = $region9
    $region8: #{tpu_custom_call.1} parent=1 // pred_region
      _
    $region9: #{tpu_custom_call.1} parent=1 // pred_fallthru
      _
    // Predicated region
    $region10: #{tpu_custom_call.1} parent=1 // pred_check
      _
    $region11: #{tpu_custom_call.1} parent=1 // pred_check_branch
      %15 = sbr.rel (0) target = $region13
    $region12: #{tpu_custom_call.1} parent=1 // pred_region
      _
    $region13: #{tpu_custom_call.1} parent=1 // pred_fallthru
      _
    // Predicated region
    $region14: #{tpu_custom_call.1} parent=1 // pred_check
      _
    $region15: #{tpu_custom_call.1} parent=1 // pred_check_branch
      %17 = sbr.rel (0) target = $region17
    $region16: #{tpu_custom_call.1} parent=1 // pred_region
      _
    $region17: #{tpu_custom_call.1} parent=1 // pred_fallthru
      _
    %v18 = vld [vmem:[%s2] sm:$0xff]
    %v19 = vld [vmem:[%s3] sm:$0x1]
    %v21 = vlaneseq
    %v22 = vshrl.u32 %v21, 7
    %v23 = vsub.s32 0, %v22
    %v24 = vrot.slane %v19, %v23
    %v26 = vadd.f32 %v18, %v24
    %v27 = vld [vmem:[%s1] sm:$0xf]
    %v28 = vld [vmem:[%s0] sm:$0xff]
    %vm29 = vcmask 31744
    %v31 = vsel %vm29, %v28, 0
    %vm33 = vcmask 1043456
    %v35 = vsel %vm33, %v27, 0
    %37 = vmatprep.subr.mxu0 0.0
    %v38 = vand.u32 %v35, 4294901760
    %39 = vmatpush1.msra.mxu0 %v38
    %40 = vmatprep.subr.mxu0 0.0
    %41 = vmatpush1.msra.mxu0 0.0
    %42 = vmatprep.subr.mxu0 0.0
    %43 = vmatpush1.msra.mxu0 0.0
    %44 = vmatprep.subr.mxu0 0.0
    %45 = vmatpush1.msra.mxu0 0.0
    %46 = vmatprep.subr.mxu0 0.0
    %47 = vmatpush1.msra.mxu0 0.0
    %48 = vmatprep.subr.mxu0 0.0
    %49 = vmatpush1.msra.mxu0 0.0
    %50 = vmatprep.subr.mxu0 0.0
    %51 = vmatpush1.msra.mxu0 0.0
    %52 = vmatprep.subr.mxu0 0.0
    %53 = vmatpush1.msra.mxu0 0.0
    %54 = vmatprep.subr.mxu0 0.0
    %55 = vmatpush1.msra.mxu0 0.0
    %56 = vmatprep.subr.mxu0 0.0
    %57 = vmatpush1.msra.mxu0 0.0
    %58 = vmatprep.subr.mxu0 0.0
    %59 = vmatpush1.msra.mxu0 0.0
    %60 = vmatprep.subr.mxu0 0.0
    %61 = vmatpush1.msra.mxu0 0.0
    %62 = vmatprep.subr.mxu0 0.0
    %63 = vmatpush1.msra.mxu0 0.0
    %64 = vmatprep.subr.mxu0 0.0
    %65 = vmatpush1.msra.mxu0 0.0
    %66 = vmatprep.subr.mxu0 0.0
    %67 = vmatpush1.msra.mxu0 0.0
    %68 = vmatprep.subr.mxu0 0.0
    %69 = vmatpush1.msra.mxu0 0.0
    %70 = vmatprep.subr.mxu0 0.0
    %71 = vmatpush1.msra.mxu0 0.0
    %72 = vmatprep.subr.mxu0 0.0
    %73 = vmatpush1.msra.mxu0 0.0
    %74 = vmatprep.subr.mxu0 0.0
    %75 = vmatpush1.msra.mxu0 0.0
    %76 = vmatprep.subr.mxu0 0.0
    %77 = vmatpush1.msra.mxu0 0.0
    %78 = vmatprep.subr.mxu0 0.0
    %79 = vmatpush1.msra.mxu0 0.0
    %80 = vmatprep.subr.mxu0 0.0
    %81 = vmatpush1.msra.mxu0 0.0
    %82 = vmatprep.subr.mxu0 0.0
    %83 = vmatpush1.msra.mxu0 0.0
    %84 = vmatprep.subr.mxu0 0.0
    %85 = vmatpush1.msra.mxu0 0.0
    %86 = vmatprep.subr.mxu0 0.0
    %87 = vmatpush1.msra.mxu0 0.0
    %88 = vmatprep.subr.mxu0 0.0
    %89 = vmatpush1.msra.mxu0 0.0
    %90 = vmatprep.subr.mxu0 0.0
    %91 = vmatpush1.msra.mxu0 0.0
    %92 = vmatprep.subr.mxu0 0.0
    %93 = vmatpush1.msra.mxu0 0.0
    %94 = vmatprep.subr.mxu0 0.0
    %95 = vmatpush1.msra.mxu0 0.0
    %96 = vmatprep.subr.mxu0 0.0
    %97 = vmatpush1.msra.mxu0 0.0
    %98 = vmatprep.subr.mxu0 0.0
    %99 = vmatpush1.msra.mxu0 0.0
    %100 = vmatprep.subr.mxu0 0.0
    %101 = vmatpush1.msra.mxu0 0.0
    %102 = vmatprep.mubr.f32.mxu0 0.0
    %v103 = vand.u32 %v31, 4294901760
    %v104 = vsub.f32 %v31, %v103
    %v105 = vand.u32 %v104, 4294901760
    %v106 = vsub.f32 %v104, %v105
    %v107 = vand.u32 %v106, 4294901760
    %108 = vmatmul.mubr.f32.gmra.mrb[0].mxu0 %v107
    %v109 = vpop.f32.mrb[0].mxu0
    %v110 = vadd.f32 %v26, %v109
    %v111 = vpop.f32.mrb[0].mxu0
    %112 = vdwg.mxu0
    %113 = vmatprep.subr.mxu0 0.0
    %v114 = vand.u32 %v35, 4294901760
    %v115 = vsub.f32 %v35, %v114
    %v116 = vand.u32 %v115, 4294901760
    %v117 = vsub.f32 %v115, %v116
    %v118 = vand.u32 %v117, 4294901760
    %119 = vmatpush1.msra.mxu0 %v118
    %120 = vmatprep.subr.mxu0 0.0
    %121 = vmatpush1.msra.mxu0 0.0
    %122 = vmatprep.subr.mxu0 0.0
    %123 = vmatpush1.msra.mxu0 0.0
    %124 = vmatprep.subr.mxu0 0.0
    %125 = vmatpush1.msra.mxu0 0.0
    %126 = vmatprep.subr.mxu0 0.0
    %127 = vmatpush1.msra.mxu0 0.0
    %128 = vmatprep.subr.mxu0 0.0
    %129 = vmatpush1.msra.mxu0 0.0
    %130 = vmatprep.subr.mxu0 0.0
    %131 = vmatpush1.msra.mxu0 0.0
    %132 = vmatprep.subr.mxu0 0.0
    %133 = vmatpush1.msra.mxu0 0.0
    %134 = vmatprep.subr.mxu0 0.0
    %135 = vmatpush1.msra.mxu0 0.0
    %136 = vmatprep.subr.mxu0 0.0
    %137 = vmatpush1.msra.mxu0 0.0
    %138 = vmatprep.subr.mxu0 0.0
    %139 = vmatpush1.msra.mxu0 0.0
    %140 = vmatprep.subr.mxu0 0.0
    %141 = vmatpush1.msra.mxu0 0.0
    %142 = vmatprep.subr.mxu0 0.0
    %143 = vmatpush1.msra.mxu0 0.0
    %144 = vmatprep.subr.mxu0 0.0
    %145 = vmatpush1.msra.mxu0 0.0
    %146 = vmatprep.subr.mxu0 0.0
    %147 = vmatpush1.msra.mxu0 0.0
    %148 = vmatprep.subr.mxu0 0.0
    %149 = vmatpush1.msra.mxu0 0.0
    %150 = vmatprep.subr.mxu0 0.0
    %151 = vmatpush1.msra.mxu0 0.0
    %152 = vmatprep.subr.mxu0 0.0
    %153 = vmatpush1.msra.mxu0 0.0
    %154 = vmatprep.subr.mxu0 0.0
    %155 = vmatpush1.msra.mxu0 0.0
    %156 = vmatprep.subr.mxu0 0.0
    %157 = vmatpush1.msra.mxu0 0.0
    %158 = vmatprep.subr.mxu0 0.0
    %159 = vmatpush1.msra.mxu0 0.0
    %160 = vmatprep.subr.mxu0 0.0
    %161 = vmatpush1.msra.mxu0 0.0
    %162 = vmatprep.subr.mxu0 0.0
    %163 = vmatpush1.msra.mxu0 0.0
    %164 = vmatprep.subr.mxu0 0.0
    %165 = vmatpush1.msra.mxu0 0.0
    %166 = vmatprep.subr.mxu0 0.0
    %167 = vmatpush1.msra.mxu0 0.0
    %168 = vmatprep.subr.mxu0 0.0
    %169 = vmatpush1.msra.mxu0 0.0
    %170 = vmatprep.subr.mxu0 0.0
    %171 = vmatpush1.msra.mxu0 0.0
    %172 = vmatprep.subr.mxu0 0.0
    %173 = vmatpush1.msra.mxu0 0.0
    %174 = vmatprep.subr.mxu0 0.0
    %175 = vmatpush1.msra.mxu0 0.0
    %176 = vmatprep.subr.mxu0 0.0
    %177 = vmatpush1.msra.mxu0 0.0
    %178 = vmatprep.subr.mxu0 0.0
    %179 = vmatpush1.msra.mxu0 0.0
    %180 = vmatprep.subr.mxu0 0.0
    %181 = vmatpush1.msra.mxu0 0.0
    %182 = vmatprep.mubr.f32.mxu0 0.0
    %v183 = vand.u32 %v31, 4294901760
    %184 = vmatmul.mubr.f32.gmra.mrb[0].mxu0 %v183
    %v185 = vpop.f32.mrb[0].mxu0
    %v186 = vadd.f32 %v110, %v185
    %v187 = vpop.f32.mrb[0].mxu0
    %188 = vdwg.mxu0
    %189 = vmatprep.subr.mxu0 0.0
    %v190 = vand.u32 %v35, 4294901760
    %v191 = vsub.f32 %v35, %v190
    %192 = vmatpush1.msra.mxu0 %v191
    %193 = vmatprep.subr.mxu0 0.0
    %194 = vmatpush1.msra.mxu0 0.0
    %195 = vmatprep.subr.mxu0 0.0
    %196 = vmatpush1.msra.mxu0 0.0
    %197 = vmatprep.subr.mxu0 0.0
    %198 = vmatpush1.msra.mxu0 0.0
    %199 = vmatprep.subr.mxu0 0.0
    %200 = vmatpush1.msra.mxu0 0.0
    %201 = vmatprep.subr.mxu0 0.0
    %202 = vmatpush1.msra.mxu0 0.0
    %203 = vmatprep.subr.mxu0 0.0
    %204 = vmatpush1.msra.mxu0 0.0
    %205 = vmatprep.subr.mxu0 0.0
    %206 = vmatpush1.msra.mxu0 0.0
    %207 = vmatprep.subr.mxu0 0.0
    %208 = vmatpush1.msra.mxu0 0.0
    %209 = vmatprep.subr.mxu0 0.0
    %210 = vmatpush1.msra.mxu0 0.0
    %211 = vmatprep.subr.mxu0 0.0
    %212 = vmatpush1.msra.mxu0 0.0
    %213 = vmatprep.subr.mxu0 0.0
    %214 = vmatpush1.msra.mxu0 0.0
    %215 = vmatprep.subr.mxu0 0.0
    %216 = vmatpush1.msra.mxu0 0.0
    %217 = vmatprep.subr.mxu0 0.0
    %218 = vmatpush1.msra.mxu0 0.0
    %219 = vmatprep.subr.mxu0 0.0
    %220 = vmatpush1.msra.mxu0 0.0
    %221 = vmatprep.subr.mxu0 0.0
    %222 = vmatpush1.msra.mxu0 0.0
    %223 = vmatprep.subr.mxu0 0.0
    %224 = vmatpush1.msra.mxu0 0.0
    %225 = vmatprep.subr.mxu0 0.0
    %226 = vmatpush1.msra.mxu0 0.0
    %227 = vmatprep.subr.mxu0 0.0
    %228 = vmatpush1.msra.mxu0 0.0
    %229 = vmatprep.subr.mxu0 0.0
    %230 = vmatpush1.msra.mxu0 0.0
    %231 = vmatprep.subr.mxu0 0.0
    %232 = vmatpush1.msra.mxu0 0.0
    %233 = vmatprep.subr.mxu0 0.0
    %234 = vmatpush1.msra.mxu0 0.0
    %235 = vmatprep.subr.mxu0 0.0
    %236 = vmatpush1.msra.mxu0 0.0
    %237 = vmatprep.subr.mxu0 0.0
    %238 = vmatpush1.msra.mxu0 0.0
    %239 = vmatprep.subr.mxu0 0.0
    %240 = vmatpush1.msra.mxu0 0.0
    %241 = vmatprep.subr.mxu0 0.0
    %242 = vmatpush1.msra.mxu0 0.0
    %243 = vmatprep.subr.mxu0 0.0
    %244 = vmatpush1.msra.mxu0 0.0
    %245 = vmatprep.subr.mxu0 0.0
    %246 = vmatpush1.msra.mxu0 0.0
    %247 = vmatprep.subr.mxu0 0.0
    %248 = vmatpush1.msra.mxu0 0.0
    %249 = vmatprep.subr.mxu0 0.0
    %250 = vmatpush1.msra.mxu0 0.0
    %251 = vmatprep.subr.mxu0 0.0
    %252 = vmatpush1.msra.mxu0 0.0
    %253 = vmatprep.subr.mxu0 0.0
    %254 = vmatpush1.msra.mxu0 0.0
    %255 = vmatprep.mubr.f32.mxu0 0.0
    %v256 = vand.u32 %v31, 4294901760
    %v257 = vsub.f32 %v31, %v256
    %258 = vmatmul.mubr.f32.gmra.mrb[0].mxu0 %v257
    %v259 = vpop.f32.mrb[0].mxu0
    %v260 = vadd.f32 %v186, %v259
    %v261 = vpop.f32.mrb[0].mxu0
    %262 = vdwg.mxu0
    %263 = vmatprep.subr.mxu0 0.0
    %v264 = vand.u32 %v35, 4294901760
    %265 = vmatpush1.msra.mxu0 %v264
    %266 = vmatprep.subr.mxu0 0.0
    %267 = vmatpush1.msra.mxu0 0.0
    %268 = vmatprep.subr.mxu0 0.0
    %269 = vmatpush1.msra.mxu0 0.0
    %270 = vmatprep.subr.mxu0 0.0
    %271 = vmatpush1.msra.mxu0 0.0
    %272 = vmatprep.subr.mxu0 0.0
    %273 = vmatpush1.msra.mxu0 0.0
    %274 = vmatprep.subr.mxu0 0.0
    %275 = vmatpush1.msra.mxu0 0.0
    %276 = vmatprep.subr.mxu0 0.0
    %277 = vmatpush1.msra.mxu0 0.0
    %278 = vmatprep.subr.mxu0 0.0
    %279 = vmatpush1.msra.mxu0 0.0
    %280 = vmatprep.subr.mxu0 0.0
    %281 = vmatpush1.msra.mxu0 0.0
    %282 = vmatprep.subr.mxu0 0.0
    %283 = vmatpush1.msra.mxu0 0.0
    %284 = vmatprep.subr.mxu0 0.0
    %285 = vmatpush1.msra.mxu0 0.0
    %286 = vmatprep.subr.mxu0 0.0
    %287 = vmatpush1.msra.mxu0 0.0
    %288 = vmatprep.subr.mxu0 0.0
    %289 = vmatpush1.msra.mxu0 0.0
    %290 = vmatprep.subr.mxu0 0.0
    %291 = vmatpush1.msra.mxu0 0.0
    %292 = vmatprep.subr.mxu0 0.0
    %293 = vmatpush1.msra.mxu0 0.0
    %294 = vmatprep.subr.mxu0 0.0
    %295 = vmatpush1.msra.mxu0 0.0
    %296 = vmatprep.subr.mxu0 0.0
    %297 = vmatpush1.msra.mxu0 0.0
    %298 = vmatprep.subr.mxu0 0.0
    %299 = vmatpush1.msra.mxu0 0.0
    %300 = vmatprep.subr.mxu0 0.0
    %301 = vmatpush1.msra.mxu0 0.0
    %302 = vmatprep.subr.mxu0 0.0
    %303 = vmatpush1.msra.mxu0 0.0
    %304 = vmatprep.subr.mxu0 0.0
    %305 = vmatpush1.msra.mxu0 0.0
    %306 = vmatprep.subr.mxu0 0.0
    %307 = vmatpush1.msra.mxu0 0.0
    %308 = vmatprep.subr.mxu0 0.0
    %309 = vmatpush1.msra.mxu0 0.0
    %310 = vmatprep.subr.mxu0 0.0
    %311 = vmatpush1.msra.mxu0 0.0
    %312 = vmatprep.subr.mxu0 0.0
    %313 = vmatpush1.msra.mxu0 0.0
    %314 = vmatprep.subr.mxu0 0.0
    %315 = vmatpush1.msra.mxu0 0.0
    %316 = vmatprep.subr.mxu0 0.0
    %317 = vmatpush1.msra.mxu0 0.0
    %318 = vmatprep.subr.mxu0 0.0
    %319 = vmatpush1.msra.mxu0 0.0
    %320 = vmatprep.subr.mxu0 0.0
    %321 = vmatpush1.msra.mxu0 0.0
    %322 = vmatprep.subr.mxu0 0.0
    %323 = vmatpush1.msra.mxu0 0.0
    %324 = vmatprep.subr.mxu0 0.0
    %325 = vmatpush1.msra.mxu0 0.0
    %326 = vmatprep.subr.mxu0 0.0
    %327 = vmatpush1.msra.mxu0 0.0
    %328 = vmatprep.mubr.f32.mxu0 0.0
    %v329 = vand.u32 %v31, 4294901760
    %v330 = vsub.f32 %v31, %v329
    %v331 = vand.u32 %v330, 4294901760
    %332 = vmatmul.mubr.f32.gmra.mrb[0].mxu0 %v331
    %v333 = vpop.f32.mrb[0].mxu0
    %v334 = vadd.f32 %v260, %v333
    %v335 = vpop.f32.mrb[0].mxu0
    %336 = vdwg.mxu0
    %337 = vmatprep.subr.mxu0 0.0
    %v338 = vand.u32 %v35, 4294901760
    %v339 = vsub.f32 %v35, %v338
    %v340 = vand.u32 %v339, 4294901760
    %341 = vmatpush1.msra.mxu0 %v340
    %342 = vmatprep.subr.mxu0 0.0
    %343 = vmatpush1.msra.mxu0 0.0
    %344 = vmatprep.subr.mxu0 0.0
    %345 = vmatpush1.msra.mxu0 0.0
    %346 = vmatprep.subr.mxu0 0.0
    %347 = vmatpush1.msra.mxu0 0.0
    %348 = vmatprep.subr.mxu0 0.0
    %349 = vmatpush1.msra.mxu0 0.0
    %350 = vmatprep.subr.mxu0 0.0
    %351 = vmatpush1.msra.mxu0 0.0
    %352 = vmatprep.subr.mxu0 0.0
    %353 = vmatpush1.msra.mxu0 0.0
    %354 = vmatprep.subr.mxu0 0.0
    %355 = vmatpush1.msra.mxu0 0.0
    %356 = vmatprep.subr.mxu0 0.0
    %357 = vmatpush1.msra.mxu0 0.0
    %358 = vmatprep.subr.mxu0 0.0
    %359 = vmatpush1.msra.mxu0 0.0
    %360 = vmatprep.subr.mxu0 0.0
    %361 = vmatpush1.msra.mxu0 0.0
    %362 = vmatprep.subr.mxu0 0.0
    %363 = vmatpush1.msra.mxu0 0.0
    %364 = vmatprep.subr.mxu0 0.0
    %365 = vmatpush1.msra.mxu0 0.0
    %366 = vmatprep.subr.mxu0 0.0
    %367 = vmatpush1.msra.mxu0 0.0
    %368 = vmatprep.subr.mxu0 0.0
    %369 = vmatpush1.msra.mxu0 0.0
    %370 = vmatprep.subr.mxu0 0.0
    %371 = vmatpush1.msra.mxu0 0.0
    %372 = vmatprep.subr.mxu0 0.0
    %373 = vmatpush1.msra.mxu0 0.0
    %374 = vmatprep.subr.mxu0 0.0
    %375 = vmatpush1.msra.mxu0 0.0
    %376 = vmatprep.subr.mxu0 0.0
    %377 = vmatpush1.msra.mxu0 0.0
    %378 = vmatprep.subr.mxu0 0.0
    %379 = vmatpush1.msra.mxu0 0.0
    %380 = vmatprep.subr.mxu0 0.0
    %381 = vmatpush1.msra.mxu0 0.0
    %382 = vmatprep.subr.mxu0 0.0
    %383 = vmatpush1.msra.mxu0 0.0
    %384 = vmatprep.subr.mxu0 0.0
    %385 = vmatpush1.msra.mxu0 0.0
    %386 = vmatprep.subr.mxu0 0.0
    %387 = vmatpush1.msra.mxu0 0.0
    %388 = vmatprep.subr.mxu0 0.0
    %389 = vmatpush1.msra.mxu0 0.0
    %390 = vmatprep.subr.mxu0 0.0
    %391 = vmatpush1.msra.mxu0 0.0
    %392 = vmatprep.subr.mxu0 0.0
    %393 = vmatpush1.msra.mxu0 0.0
    %394 = vmatprep.subr.mxu0 0.0
    %395 = vmatpush1.msra.mxu0 0.0
    %396 = vmatprep.subr.mxu0 0.0
    %397 = vmatpush1.msra.mxu0 0.0
    %398 = vmatprep.subr.mxu0 0.0
    %399 = vmatpush1.msra.mxu0 0.0
    %400 = vmatprep.subr.mxu0 0.0
    %401 = vmatpush1.msra.mxu0 0.0
    %402 = vmatprep.subr.mxu0 0.0
    %403 = vmatpush1.msra.mxu0 0.0
    %404 = vmatprep.mubr.f32.mxu0 0.0
    %v405 = vand.u32 %v31, 4294901760
    %406 = vmatmul.mubr.f32.gmra.mrb[0].mxu0 %v405
    %v407 = vpop.f32.mrb[0].mxu0
    %v408 = vadd.f32 %v334, %v407
    %v409 = vpop.f32.mrb[0].mxu0
    %410 = vdwg.mxu0
    %411 = vmatprep.subr.mxu0 0.0
    %v412 = vand.u32 %v35, 4294901760
    %413 = vmatpush1.msra.mxu0 %v412
    %414 = vmatprep.subr.mxu0 0.0
    %415 = vmatpush1.msra.mxu0 0.0
    %416 = vmatprep.subr.mxu0 0.0
    %417 = vmatpush1.msra.mxu0 0.0
    %418 = vmatprep.subr.mxu0 0.0
    %419 = vmatpush1.msra.mxu0 0.0
    %420 = vmatprep.subr.mxu0 0.0
    %421 = vmatpush1.msra.mxu0 0.0
    %422 = vmatprep.subr.mxu0 0.0
    %423 = vmatpush1.msra.mxu0 0.0
    %424 = vmatprep.subr.mxu0 0.0
    %425 = vmatpush1.msra.mxu0 0.0
    %426 = vmatprep.subr.mxu0 0.0
    %427 = vmatpush1.msra.mxu0 0.0
    %428 = vmatprep.subr.mxu0 0.0
    %429 = vmatpush1.msra.mxu0 0.0
    %430 = vmatprep.subr.mxu0 0.0
    %431 = vmatpush1.msra.mxu0 0.0
    %432 = vmatprep.subr.mxu0 0.0
    %433 = vmatpush1.msra.mxu0 0.0
    %434 = vmatprep.subr.mxu0 0.0
    %435 = vmatpush1.msra.mxu0 0.0
    %436 = vmatprep.subr.mxu0 0.0
    %437 = vmatpush1.msra.mxu0 0.0
    %438 = vmatprep.subr.mxu0 0.0
    %439 = vmatpush1.msra.mxu0 0.0
    %440 = vmatprep.subr.mxu0 0.0
    %441 = vmatpush1.msra.mxu0 0.0
    %442 = vmatprep.subr.mxu0 0.0
    %443 = vmatpush1.msra.mxu0 0.0
    %444 = vmatprep.subr.mxu0 0.0
    %445 = vmatpush1.msra.mxu0 0.0
    %446 = vmatprep.subr.mxu0 0.0
    %447 = vmatpush1.msra.mxu0 0.0
    %448 = vmatprep.subr.mxu0 0.0
    %449 = vmatpush1.msra.mxu0 0.0
    %450 = vmatprep.subr.mxu0 0.0
    %451 = vmatpush1.msra.mxu0 0.0
    %452 = vmatprep.subr.mxu0 0.0
    %453 = vmatpush1.msra.mxu0 0.0
    %454 = vmatprep.subr.mxu0 0.0
    %455 = vmatpush1.msra.mxu0 0.0
    %456 = vmatprep.subr.mxu0 0.0
    %457 = vmatpush1.msra.mxu0 0.0
    %458 = vmatprep.subr.mxu0 0.0
    %459 = vmatpush1.msra.mxu0 0.0
    %460 = vmatprep.subr.mxu0 0.0
    %461 = vmatpush1.msra.mxu0 0.0
    %462 = vmatprep.subr.mxu0 0.0
    %463 = vmatpush1.msra.mxu0 0.0
    %464 = vmatprep.subr.mxu0 0.0
    %465 = vmatpush1.msra.mxu0 0.0
    %466 = vmatprep.subr.mxu0 0.0
    %467 = vmatpush1.msra.mxu0 0.0
    %468 = vmatprep.subr.mxu0 0.0
    %469 = vmatpush1.msra.mxu0 0.0
    %470 = vmatprep.subr.mxu0 0.0
    %471 = vmatpush1.msra.mxu0 0.0
    %472 = vmatprep.subr.mxu0 0.0
    %473 = vmatpush1.msra.mxu0 0.0
    %474 = vmatprep.subr.mxu0 0.0
    %475 = vmatpush1.msra.mxu0 0.0
    %476 = vmatprep.mubr.f32.mxu0 0.0
    %v477 = vand.u32 %v31, 4294901760
    %478 = vmatmul.mubr.f32.gmra.mrb[0].mxu0 %v477
    %v479 = vpop.f32.mrb[0].mxu0
    %v480 = vadd.f32 %v408, %v479
    %v481 = vpop.f32.mrb[0].mxu0
    %482 = vdwg.mxu0
    %483 = vst [vmem:[#allocation2] sm:$0xff] %v480
    %s484 = scalar_lea.vmem %s0, 8
    %v485 = vld [vmem:[%s484] sm:$0xff]
    %v487 = vsel %vm29, %v485, 0
    %489 = vmatprep.subr.mxu0 0.0
    %v490 = vand.u32 %v35, 4294901760
    %491 = vmatpush1.msra.mxu0 %v490
    %492 = vmatprep.subr.mxu0 0.0
    %493 = vmatpush1.msra.mxu0 0.0
    %494 = vmatprep.subr.mxu0 0.0
    %495 = vmatpush1.msra.mxu0 0.0
    %496 = vmatprep.subr.mxu0 0.0
    %497 = vmatpush1.msra.mxu0 0.0
    %498 = vmatprep.subr.mxu0 0.0
    %499 = vmatpush1.msra.mxu0 0.0
    %500 = vmatprep.subr.mxu0 0.0
    %501 = vmatpush1.msra.mxu0 0.0
    %502 = vmatprep.subr.mxu0 0.0
    %503 = vmatpush1.msra.mxu0 0.0
    %504 = vmatprep.subr.mxu0 0.0
    %505 = vmatpush1.msra.mxu0 0.0
    %506 = vmatprep.subr.mxu0 0.0
    %507 = vmatpush1.msra.mxu0 0.0
    %508 = vmatprep.subr.mxu0 0.0
    %509 = vmatpush1.msra.mxu0 0.0
    %510 = vmatprep.subr.mxu0 0.0
    %511 = vmatpush1.msra.mxu0 0.0
    %512 = vmatprep.subr.mxu0 0.0
    %513 = vmatpush1.msra.mxu0 0.0
    %514 = vmatprep.subr.mxu0 0.0
    %515 = vmatpush1.msra.mxu0 0.0
    %516 = vmatprep.subr.mxu0 0.0
    %517 = vmatpush1.msra.mxu0 0.0
    %518 = vmatprep.subr.mxu0 0.0
    %519 = vmatpush1.msra.mxu0 0.0
    %520 = vmatprep.subr.mxu0 0.0
    %521 = vmatpush1.msra.mxu0 0.0
    %522 = vmatprep.subr.mxu0 0.0
    %523 = vmatpush1.msra.mxu0 0.0
    %524 = vmatprep.subr.mxu0 0.0
    %525 = vmatpush1.msra.mxu0 0.0
    %526 = vmatprep.subr.mxu0 0.0
    %527 = vmatpush1.msra.mxu0 0.0
    %528 = vmatprep.subr.mxu0 0.0
    %529 = vmatpush1.msra.mxu0 0.0
    %530 = vmatprep.subr.mxu0 0.0
    %531 = vmatpush1.msra.mxu0 0.0
    %532 = vmatprep.subr.mxu0 0.0
    %533 = vmatpush1.msra.mxu0 0.0
    %534 = vmatprep.subr.mxu0 0.0
    %535 = vmatpush1.msra.mxu0 0.0
    %536 = vmatprep.subr.mxu0 0.0
    %537 = vmatpush1.msra.mxu0 0.0
    %538 = vmatprep.subr.mxu0 0.0
    %539 = vmatpush1.msra.mxu0 0.0
    %540 = vmatprep.subr.mxu0 0.0
    %541 = vmatpush1.msra.mxu0 0.0
    %542 = vmatprep.subr.mxu0 0.0
    %543 = vmatpush1.msra.mxu0 0.0
    %544 = vmatprep.subr.mxu0 0.0
    %545 = vmatpush1.msra.mxu0 0.0
    %546 = vmatprep.subr.mxu0 0.0
    %547 = vmatpush1.msra.mxu0 0.0
    %548 = vmatprep.subr.mxu0 0.0
    %549 = vmatpush1.msra.mxu0 0.0
    %550 = vmatprep.subr.mxu0 0.0
    %551 = vmatpush1.msra.mxu0 0.0
    %552 = vmatprep.subr.mxu0 0.0
    %553 = vmatpush1.msra.mxu0 0.0
    %554 = vmatprep.mubr.f32.mxu0 0.0
    %v555 = vand.u32 %v487, 4294901760
    %v556 = vsub.f32 %v487, %v555
    %v557 = vand.u32 %v556, 4294901760
    %v558 = vsub.f32 %v556, %v557
    %v559 = vand.u32 %v558, 4294901760
    %560 = vmatmul.mubr.f32.gmra.mrb[0].mxu0 %v559
    %v561 = vpop.f32.mrb[0].mxu0
    %v562 = vadd.f32 %v26, %v561
    %v563 = vpop.f32.mrb[0].mxu0
    %564 = vdwg.mxu0
    %565 = vmatprep.subr.mxu0 0.0
    %v566 = vand.u32 %v35, 4294901760
    %v567 = vsub.f32 %v35, %v566
    %v568 = vand.u32 %v567, 4294901760
    %v569 = vsub.f32 %v567, %v568
    %v570 = vand.u32 %v569, 4294901760
    %571 = vmatpush1.msra.mxu0 %v570
    %572 = vmatprep.subr.mxu0 0.0
    %573 = vmatpush1.msra.mxu0 0.0
    %574 = vmatprep.subr.mxu0 0.0
    %575 = vmatpush1.msra.mxu0 0.0
    %576 = vmatprep.subr.mxu0 0.0
    %577 = vmatpush1.msra.mxu0 0.0
    %578 = vmatprep.subr.mxu0 0.0
    %579 = vmatpush1.msra.mxu0 0.0
    %580 = vmatprep.subr.mxu0 0.0
    %581 = vmatpush1.msra.mxu0 0.0
    %582 = vmatprep.subr.mxu0 0.0
    %583 = vmatpush1.msra.mxu0 0.0
    %584 = vmatprep.subr.mxu0 0.0
    %585 = vmatpush1.msra.mxu0 0.0
    %586 = vmatprep.subr.mxu0 0.0
    %587 = vmatpush1.msra.mxu0 0.0
    %588 = vmatprep.subr.mxu0 0.0
    %589 = vmatpush1.msra.mxu0 0.0
    %590 = vmatprep.subr.mxu0 0.0
    %591 = vmatpush1.msra.mxu0 0.0
    %592 = vmatprep.subr.mxu0 0.0
    %593 = vmatpush1.msra.mxu0 0.0
    %594 = vmatprep.subr.mxu0 0.0
    %595 = vmatpush1.msra.mxu0 0.0
    %596 = vmatprep.subr.mxu0 0.0
    %597 = vmatpush1.msra.mxu0 0.0
    %598 = vmatprep.subr.mxu0 0.0
    %599 = vmatpush1.msra.mxu0 0.0
    %600 = vmatprep.subr.mxu0 0.0
    %601 = vmatpush1.msra.mxu0 0.0
    %602 = vmatprep.subr.mxu0 0.0
    %603 = vmatpush1.msra.mxu0 0.0
    %604 = vmatprep.subr.mxu0 0.0
    %605 = vmatpush1.msra.mxu0 0.0
    %606 = vmatprep.subr.mxu0 0.0
    %607 = vmatpush1.msra.mxu0 0.0
    %608 = vmatprep.subr.mxu0 0.0
    %609 = vmatpush1.msra.mxu0 0.0
    %610 = vmatprep.subr.mxu0 0.0
    %611 = vmatpush1.msra.mxu0 0.0
    %612 = vmatprep.subr.mxu0 0.0
    %613 = vmatpush1.msra.mxu0 0.0
    %614 = vmatprep.subr.mxu0 0.0
    %615 = vmatpush1.msra.mxu0 0.0
    %616 = vmatprep.subr.mxu0 0.0
    %617 = vmatpush1.msra.mxu0 0.0
    %618 = vmatprep.subr.mxu0 0.0
    %619 = vmatpush1.msra.mxu0 0.0
    %620 = vmatprep.subr.mxu0 0.0
    %621 = vmatpush1.msra.mxu0 0.0
    %622 = vmatprep.subr.mxu0 0.0
    %623 = vmatpush1.msra.mxu0 0.0
    %624 = vmatprep.subr.mxu0 0.0
    %625 = vmatpush1.msra.mxu0 0.0
    %626 = vmatprep.subr.mxu0 0.0
    %627 = vmatpush1.msra.mxu0 0.0
    %628 = vmatprep.subr.mxu0 0.0
    %629 = vmatpush1.msra.mxu0 0.0
    %630 = vmatprep.subr.mxu0 0.0
    %631 = vmatpush1.msra.mxu0 0.0
    %632 = vmatprep.subr.mxu0 0.0
    %633 = vmatpush1.msra.mxu0 0.0
    %634 = vmatprep.mubr.f32.mxu0 0.0
    %v635 = vand.u32 %v487, 4294901760
    %636 = vmatmul.mubr.f32.gmra.mrb[0].mxu0 %v635
    %v637 = vpop.f32.mrb[0].mxu0
    %v638 = vadd.f32 %v562, %v637
    %v639 = vpop.f32.mrb[0].mxu0
    %640 = vdwg.mxu0
    %641 = vmatprep.subr.mxu0 0.0
    %v642 = vand.u32 %v35, 4294901760
    %v643 = vsub.f32 %v35, %v642
    %644 = vmatpush1.msra.mxu0 %v643
    %645 = vmatprep.subr.mxu0 0.0
    %646 = vmatpush1.msra.mxu0 0.0
    %647 = vmatprep.subr.mxu0 0.0
    %648 = vmatpush1.msra.mxu0 0.0
    %649 = vmatprep.subr.mxu0 0.0
    %650 = vmatpush1.msra.mxu0 0.0
    %651 = vmatprep.subr.mxu0 0.0
    %652 = vmatpush1.msra.mxu0 0.0
    %653 = vmatprep.subr.mxu0 0.0
    %654 = vmatpush1.msra.mxu0 0.0
    %655 = vmatprep.subr.mxu0 0.0
    %656 = vmatpush1.msra.mxu0 0.0
    %657 = vmatprep.subr.mxu0 0.0
    %658 = vmatpush1.msra.mxu0 0.0
    %659 = vmatprep.subr.mxu0 0.0
    %660 = vmatpush1.msra.mxu0 0.0
    %661 = vmatprep.subr.mxu0 0.0
    %662 = vmatpush1.msra.mxu0 0.0
    %663 = vmatprep.subr.mxu0 0.0
    %664 = vmatpush1.msra.mxu0 0.0
    %665 = vmatprep.subr.mxu0 0.0
    %666 = vmatpush1.msra.mxu0 0.0
    %667 = vmatprep.subr.mxu0 0.0
    %668 = vmatpush1.msra.mxu0 0.0
    %669 = vmatprep.subr.mxu0 0.0
    %670 = vmatpush1.msra.mxu0 0.0
    %671 = vmatprep.subr.mxu0 0.0
    %672 = vmatpush1.msra.mxu0 0.0
    %673 = vmatprep.subr.mxu0 0.0
    %674 = vmatpush1.msra.mxu0 0.0
    %675 = vmatprep.subr.mxu0 0.0
    %676 = vmatpush1.msra.mxu0 0.0
    %677 = vmatprep.subr.mxu0 0.0
    %678 = vmatpush1.msra.mxu0 0.0
    %679 = vmatprep.subr.mxu0 0.0
    %680 = vmatpush1.msra.mxu0 0.0
    %681 = vmatprep.subr.mxu0 0.0
    %682 = vmatpush1.msra.mxu0 0.0
    %683 = vmatprep.subr.mxu0 0.0
    %684 = vmatpush1.msra.mxu0 0.0
    %685 = vmatprep.subr.mxu0 0.0
    %686 = vmatpush1.msra.mxu0 0.0
    %687 = vmatprep.subr.mxu0 0.0
    %688 = vmatpush1.msra.mxu0 0.0
    %689 = vmatprep.subr.mxu0 0.0
    %690 = vmatpush1.msra.mxu0 0.0
    %691 = vmatprep.subr.mxu0 0.0
    %692 = vmatpush1.msra.mxu0 0.0
    %693 = vmatprep.subr.mxu0 0.0
    %694 = vmatpush1.msra.mxu0 0.0
    %695 = vmatprep.subr.mxu0 0.0
    %696 = vmatpush1.msra.mxu0 0.0
    %697 = vmatprep.subr.mxu0 0.0
    %698 = vmatpush1.msra.mxu0 0.0
    %699 = vmatprep.subr.mxu0 0.0
    %700 = vmatpush1.msra.mxu0 0.0
    %701 = vmatprep.subr.mxu0 0.0
    %702 = vmatpush1.msra.mxu0 0.0
    %703 = vmatprep.subr.mxu0 0.0
    %704 = vmatpush1.msra.mxu0 0.0
    %705 = vmatprep.subr.mxu0 0.0
    %706 = vmatpush1.msra.mxu0 0.0
    %707 = vmatprep.mubr.f32.mxu0 0.0
    %v708 = vand.u32 %v487, 4294901760
    %v709 = vsub.f32 %v487, %v708
    %710 = vmatmul.mubr.f32.gmra.mrb[0].mxu0 %v709
    %v711 = vpop.f32.mrb[0].mxu0
    %v712 = vadd.f32 %v638, %v711
    %v713 = vpop.f32.mrb[0].mxu0
    %714 = vdwg.mxu0
    %715 = vmatprep.subr.mxu0 0.0
    %v716 = vand.u32 %v35, 4294901760
    %717 = vmatpush1.msra.mxu0 %v716
    %718 = vmatprep.subr.mxu0 0.0
    %719 = vmatpush1.msra.mxu0 0.0
    %720 = vmatprep.subr.mxu0 0.0
    %721 = vmatpush1.msra.mxu0 0.0
    %722 = vmatprep.subr.mxu0 0.0
    %723 = vmatpush1.msra.mxu0 0.0
    %724 = vmatprep.subr.mxu0 0.0
    %725 = vmatpush1.msra.mxu0 0.0
    %726 = vmatprep.subr.mxu0 0.0
    %727 = vmatpush1.msra.mxu0 0.0
    %728 = vmatprep.subr.mxu0 0.0
    %729 = vmatpush1.msra.mxu0 0.0
    %730 = vmatprep.subr.mxu0 0.0
    %731 = vmatpush1.msra.mxu0 0.0
    %732 = vmatprep.subr.mxu0 0.0
    %733 = vmatpush1.msra.mxu0 0.0
    %734 = vmatprep.subr.mxu0 0.0
    %735 = vmatpush1.msra.mxu0 0.0
    %736 = vmatprep.subr.mxu0 0.0
    %737 = vmatpush1.msra.mxu0 0.0
    %738 = vmatprep.subr.mxu0 0.0
    %739 = vmatpush1.msra.mxu0 0.0
    %740 = vmatprep.subr.mxu0 0.0
    %741 = vmatpush1.msra.mxu0 0.0
    %742 = vmatprep.subr.mxu0 0.0
    %743 = vmatpush1.msra.mxu0 0.0
    %744 = vmatprep.subr.mxu0 0.0
    %745 = vmatpush1.msra.mxu0 0.0
    %746 = vmatprep.subr.mxu0 0.0
    %747 = vmatpush1.msra.mxu0 0.0
    %748 = vmatprep.subr.mxu0 0.0
    %749 = vmatpush1.msra.mxu0 0.0
    %750 = vmatprep.subr.mxu0 0.0
    %751 = vmatpush1.msra.mxu0 0.0
    %752 = vmatprep.subr.mxu0 0.0
    %753 = vmatpush1.msra.mxu0 0.0
    %754 = vmatprep.subr.mxu0 0.0
    %755 = vmatpush1.msra.mxu0 0.0
    %756 = vmatprep.subr.mxu0 0.0
    %757 = vmatpush1.msra.mxu0 0.0
    %758 = vmatprep.subr.mxu0 0.0
    %759 = vmatpush1.msra.mxu0 0.0
    %760 = vmatprep.subr.mxu0 0.0
    %761 = vmatpush1.msra.mxu0 0.0
    %762 = vmatprep.subr.mxu0 0.0
    %763 = vmatpush1.msra.mxu0 0.0
    %764 = vmatprep.subr.mxu0 0.0
    %765 = vmatpush1.msra.mxu0 0.0
    %766 = vmatprep.subr.mxu0 0.0
    %767 = vmatpush1.msra.mxu0 0.0
    %768 = vmatprep.subr.mxu0 0.0
    %769 = vmatpush1.msra.mxu0 0.0
    %770 = vmatprep.subr.mxu0 0.0
    %771 = vmatpush1.msra.mxu0 0.0
    %772 = vmatprep.subr.mxu0 0.0
    %773 = vmatpush1.msra.mxu0 0.0
    %774 = vmatprep.subr.mxu0 0.0
    %775 = vmatpush1.msra.mxu0 0.0
    %776 = vmatprep.subr.mxu0 0.0
    %777 = vmatpush1.msra.mxu0 0.0
    %778 = vmatprep.subr.mxu0 0.0
    %779 = vmatpush1.msra.mxu0 0.0
    %780 = vmatprep.mubr.f32.mxu0 0.0
    %v781 = vand.u32 %v487, 4294901760
    %v782 = vsub.f32 %v487, %v781
    %v783 = vand.u32 %v782, 4294901760
    %784 = vmatmul.mubr.f32.gmra.mrb[0].mxu0 %v783
    %v785 = vpop.f32.mrb[0].mxu0
    %v786 = vadd.f32 %v712, %v785
    %v787 = vpop.f32.mrb[0].mxu0
    %788 = vdwg.mxu0
    %789 = vmatprep.subr.mxu0 0.0
    %v790 = vand.u32 %v35, 4294901760
    %v791 = vsub.f32 %v35, %v790
    %v792 = vand.u32 %v791, 4294901760
    %793 = vmatpush1.msra.mxu0 %v792
    %794 = vmatprep.subr.mxu0 0.0
    %795 = vmatpush1.msra.mxu0 0.0
    %796 = vmatprep.subr.mxu0 0.0
    %797 = vmatpush1.msra.mxu0 0.0
    %798 = vmatprep.subr.mxu0 0.0
    %799 = vmatpush1.msra.mxu0 0.0
    %800 = vmatprep.subr.mxu0 0.0
    %801 = vmatpush1.msra.mxu0 0.0
    %802 = vmatprep.subr.mxu0 0.0
    %803 = vmatpush1.msra.mxu0 0.0
    %804 = vmatprep.subr.mxu0 0.0
    %805 = vmatpush1.msra.mxu0 0.0
    %806 = vmatprep.subr.mxu0 0.0
    %807 = vmatpush1.msra.mxu0 0.0
    %808 = vmatprep.subr.mxu0 0.0
    %809 = vmatpush1.msra.mxu0 0.0
    %810 = vmatprep.subr.mxu0 0.0
    %811 = vmatpush1.msra.mxu0 0.0
    %812 = vmatprep.subr.mxu0 0.0
    %813 = vmatpush1.msra.mxu0 0.0
    %814 = vmatprep.subr.mxu0 0.0
    %815 = vmatpush1.msra.mxu0 0.0
    %816 = vmatprep.subr.mxu0 0.0
    %817 = vmatpush1.msra.mxu0 0.0
    %818 = vmatprep.subr.mxu0 0.0
    %819 = vmatpush1.msra.mxu0 0.0
    %820 = vmatprep.subr.mxu0 0.0
    %821 = vmatpush1.msra.mxu0 0.0
    %822 = vmatprep.subr.mxu0 0.0
    %823 = vmatpush1.msra.mxu0 0.0
    %824 = vmatprep.subr.mxu0 0.0
    %825 = vmatpush1.msra.mxu0 0.0
    %826 = vmatprep.subr.mxu0 0.0
    %827 = vmatpush1.msra.mxu0 0.0
    %828 = vmatprep.subr.mxu0 0.0
    %829 = vmatpush1.msra.mxu0 0.0
    %830 = vmatprep.subr.mxu0 0.0
    %831 = vmatpush1.msra.mxu0 0.0
    %832 = vmatprep.subr.mxu0 0.0
    %833 = vmatpush1.msra.mxu0 0.0
    %834 = vmatprep.subr.mxu0 0.0
    %835 = vmatpush1.msra.mxu0 0.0
    %836 = vmatprep.subr.mxu0 0.0
    %837 = vmatpush1.msra.mxu0 0.0
    %838 = vmatprep.subr.mxu0 0.0
    %839 = vmatpush1.msra.mxu0 0.0
    %840 = vmatprep.subr.mxu0 0.0
    %841 = vmatpush1.msra.mxu0 0.0
    %842 = vmatprep.subr.mxu0 0.0
    %843 = vmatpush1.msra.mxu0 0.0
    %844 = vmatprep.subr.mxu0 0.0
    %845 = vmatpush1.msra.mxu0 0.0
    %846 = vmatprep.subr.mxu0 0.0
    %847 = vmatpush1.msra.mxu0 0.0
    %848 = vmatprep.subr.mxu0 0.0
    %849 = vmatpush1.msra.mxu0 0.0
    %850 = vmatprep.subr.mxu0 0.0
    %851 = vmatpush1.msra.mxu0 0.0
    %852 = vmatprep.subr.mxu0 0.0
    %853 = vmatpush1.msra.mxu0 0.0
    %854 = vmatprep.subr.mxu0 0.0
    %855 = vmatpush1.msra.mxu0 0.0
    %856 = vmatprep.mubr.f32.mxu0 0.0
    %v857 = vand.u32 %v487, 4294901760
    %858 = vmatmul.mubr.f32.gmra.mrb[0].mxu0 %v857
    %v859 = vpop.f32.mrb[0].mxu0
    %v860 = vadd.f32 %v786, %v859
    %v861 = vpop.f32.mrb[0].mxu0
    %862 = vdwg.mxu0
    %863 = vmatprep.subr.mxu0 0.0
    %v864 = vand.u32 %v35, 4294901760
    %865 = vmatpush1.msra.mxu0 %v864
    %866 = vmatprep.subr.mxu0 0.0
    %867 = vmatpush1.msra.mxu0 0.0
    %868 = vmatprep.subr.mxu0 0.0
    %869 = vmatpush1.msra.mxu0 0.0
    %870 = vmatprep.subr.mxu0 0.0
    %871 = vmatpush1.msra.mxu0 0.0
    %872 = vmatprep.subr.mxu0 0.0
    %873 = vmatpush1.msra.mxu0 0.0
    %874 = vmatprep.subr.mxu0 0.0
    %875 = vmatpush1.msra.mxu0 0.0
    %876 = vmatprep.subr.mxu0 0.0
    %877 = vmatpush1.msra.mxu0 0.0
    %878 = vmatprep.subr.mxu0 0.0
    %879 = vmatpush1.msra.mxu0 0.0
    %880 = vmatprep.subr.mxu0 0.0
    %881 = vmatpush1.msra.mxu0 0.0
    %882 = vmatprep.subr.mxu0 0.0
    %883 = vmatpush1.msra.mxu0 0.0
    %884 = vmatprep.subr.mxu0 0.0
    %885 = vmatpush1.msra.mxu0 0.0
    %886 = vmatprep.subr.mxu0 0.0
    %887 = vmatpush1.msra.mxu0 0.0
    %888 = vmatprep.subr.mxu0 0.0
    %889 = vmatpush1.msra.mxu0 0.0
    %890 = vmatprep.subr.mxu0 0.0
    %891 = vmatpush1.msra.mxu0 0.0
    %892 = vmatprep.subr.mxu0 0.0
    %893 = vmatpush1.msra.mxu0 0.0
    %894 = vmatprep.subr.mxu0 0.0
    %895 = vmatpush1.msra.mxu0 0.0
    %896 = vmatprep.subr.mxu0 0.0
    %897 = vmatpush1.msra.mxu0 0.0
    %898 = vmatprep.subr.mxu0 0.0
    %899 = vmatpush1.msra.mxu0 0.0
    %900 = vmatprep.subr.mxu0 0.0
    %901 = vmatpush1.msra.mxu0 0.0
    %902 = vmatprep.subr.mxu0 0.0
    %903 = vmatpush1.msra.mxu0 0.0
    %904 = vmatprep.subr.mxu0 0.0
    %905 = vmatpush1.msra.mxu0 0.0
    %906 = vmatprep.subr.mxu0 0.0
    %907 = vmatpush1.msra.mxu0 0.0
    %908 = vmatprep.subr.mxu0 0.0
    %909 = vmatpush1.msra.mxu0 0.0
    %910 = vmatprep.subr.mxu0 0.0
    %911 = vmatpush1.msra.mxu0 0.0
    %912 = vmatprep.subr.mxu0 0.0
    %913 = vmatpush1.msra.mxu0 0.0
    %914 = vmatprep.subr.mxu0 0.0
    %915 = vmatpush1.msra.mxu0 0.0
    %916 = vmatprep.subr.mxu0 0.0
    %917 = vmatpush1.msra.mxu0 0.0
    %918 = vmatprep.subr.mxu0 0.0
    %919 = vmatpush1.msra.mxu0 0.0
    %920 = vmatprep.subr.mxu0 0.0
    %921 = vmatpush1.msra.mxu0 0.0
    %922 = vmatprep.subr.mxu0 0.0
    %923 = vmatpush1.msra.mxu0 0.0
    %924 = vmatprep.subr.mxu0 0.0
    %925 = vmatpush1.msra.mxu0 0.0
    %926 = vmatprep.subr.mxu0 0.0
    %927 = vmatpush1.msra.mxu0 0.0
    %928 = vmatprep.mubr.f32.mxu0 0.0
    %v929 = vand.u32 %v487, 4294901760
    %930 = vmatmul.mubr.f32.gmra.mrb[0].mxu0 %v929
    %v931 = vpop.f32.mrb[0].mxu0
    %v932 = vadd.f32 %v860, %v931
    %v933 = vpop.f32.mrb[0].mxu0
    %934 = vdwg.mxu0
    %s935 = scalar_lea.vmem [#allocation2], 8
    %936 = vst [vmem:[%s935] sm:$0xff] %v932
    // Predicated region
    $region18: #{tpu_custom_call.1} parent=1 // pred_check
      _
    $region19: #{tpu_custom_call.1} parent=1 // pred_check_branch
      %938 = sbr.rel (0) target = $region21
    $region20: #{tpu_custom_call.1} parent=1 // pred_region
      %s940 = ssub.s32 256, 256
      %941 = vsyncadd [#allocation3], %s940
      %s942 = sshll.u32 [#allocation2], 4
      %s943 = int_to_ptr.vmem [resolvable:$true] %s942
      %948 = dma.vmem_to_hbm [thread:$0]  %s943, 256, %s4, [#allocation3], 128, 128, 8
    $region21: #{tpu_custom_call.1} parent=1 // pred_fallthru
      _
    // Predicated region
    $region22: #{tpu_custom_call.1} parent=1 // pred_check
      _
    $region23: #{tpu_custom_call.1} parent=1 // pred_check_branch
      %950 = sbr.rel (0) target = $region25
    $region24: #{tpu_custom_call.1} parent=1 // pred_region
      %951 = dma.done [#allocation3], 256
    $region25: #{tpu_custom_call.1} parent=1 // pred_fallthru
      _
    %952 = vsyncpa [#allocation3], 1

</llo_original>
